<compile_context>
chip_gen: v6e
topology: v6e:2x2x1
jax: 0.10.0
libtpu: 0.0.40
codegen_flags: <defaults>
</compile_context>

<pallas_src>
import functools

import jax
import jax.numpy as jnp
import numpy as np
from jax.experimental import pallas as pl
from jax.experimental.pallas import tpu as pltpu

LANES = 128
HIDDEN = 64


def dueling_dqn_kernel(x_ref, w_ref, b_ref, out_ref, *, state_size):
    """Fused forward: 4 lane-dense 128-wide matmuls; dueling combine is
    pre-folded into the layer-3 weights, so the epilogue is a plain store."""
    wdt = w_ref.dtype

    def dense(h, layer, k=LANES):
        # bf16 (or f32) MXU matmul, f32 accumulation; bias add in f32 (v5e-safe).
        return (jnp.dot(h.astype(wdt), w_ref[layer, :k, :],
                        preferred_element_type=jnp.float32)
                + b_ref[layer:layer + 1, :])

    # trunk: fc1 -> relu -> fc2 -> relu (padded lanes stay exactly 0)
    h = jnp.maximum(dense(x_ref[...], 0, k=state_size), 0.0)
    h = jnp.maximum(dense(h, 1), 0.0)

    # fused adv/val hidden layer: lanes [0:64] = adv hidden, [64:128] = val hidden
    hav = jnp.maximum(dense(h, 2), 0.0)

    # fused head with (val + adv - mean(adv)) folded into the packed weights;
    # lanes [0:A] are the Q-values, lanes [A:] are exactly 0 -> lane-dense store.
    out_ref[...] = dense(hav, 3).astype(out_ref.dtype)


def _round_up(a, m):
    return (a + m - 1) // m * m


def dueling_dqn_forward(x, w_slab, b_slab, *, block_batch=1024):
    """x: [B, state_size].  Returns lane-padded Q slab [B, 128] f32
    (Q-values live in lanes [0:action_size], the rest are 0)."""
    B, S = x.shape
    assert S <= LANES

    # batch tile: multiple of 8 sublanes, capped at block_batch
    TB = min(block_batch, _round_up(B, 8))
    # v7x: keep >= 2 grid steps so the "parallel" batch axis can shard across
    # both TensorCores (no-op on v5e/v6e and for tiny batches).
    if B > 8 and pl.cdiv(B, TB) < 2:
        TB = _round_up(pl.cdiv(B, 2), 8)
    grid = (pl.cdiv(B, TB),)

    kernel = functools.partial(dueling_dqn_kernel, state_size=S)

    return pl.pallas_call(
        kernel,
        out_shape=jax.ShapeDtypeStruct((B, LANES), jnp.float32),
        grid_spec=pltpu.PrefetchScalarGridSpec(
            num_scalar_prefetch=0,
            grid=grid,
            in_specs=[
                # activations stream, unpadded (last dim == full array dim)
                pl.BlockSpec((TB, S), lambda i: (i, 0)),
                # weights + biases resident in VMEM (constant index_map)
                pl.BlockSpec((4, LANES, LANES), lambda i: (0, 0, 0)),
                pl.BlockSpec((4, LANES), lambda i: (0, 0)),
            ],
            out_specs=pl.BlockSpec((TB, LANES), lambda i: (i, 0)),
        ),
        compiler_params=pltpu.CompilerParams(
            dimension_semantics=("parallel",)),
    )(x, w_slab, b_slab)


def init_params(key, state_size, action_size, hidden=HIDDEN):
    """Deterministic init mimicking nn.Linear's U(-1/sqrt(fan_in), 1/sqrt(fan_in))."""
    def linear(k, fan_in, fan_out):
        kw, kb = jax.random.split(k)
        bound = 1.0 / np.sqrt(fan_in)
        w = jax.random.uniform(kw, (fan_in, fan_out), jnp.float32, -bound, bound)
        b = jax.random.uniform(kb, (1, fan_out), jnp.float32, -bound, bound)
        return w, b

    keys = jax.random.split(key, 6)
    p = {}
    p["w1"], p["b1"] = linear(keys[0], state_size, hidden)
    p["w2"], p["b2"] = linear(keys[1], hidden, hidden)
    p["w1_adv"], p["b1_adv"] = linear(keys[2], hidden, hidden)
    p["w2_adv"], p["b2_adv"] = linear(keys[3], hidden, action_size)
    p["w1_val"], p["b1_val"] = linear(keys[4], hidden, hidden)
    p["w2_val"], p["b2_val"] = linear(keys[5], hidden, 1)
    return p


def pack_params(p, state_size, action_size, weight_dtype=jnp.bfloat16):
    """Pack the six linears into one [4,128,128] weight slab + one [4,128] bias slab.

    layer 0: fc1                 rows [0:S)   cols [0:64)
    layer 1: fc2                 rows [0:64)  cols [0:64)
    layer 2: fc1_adv || fc1_val  rows [0:64)  cols [0:64) || [64:128)
    layer 3: (block-diag head) @ C, where C folds the dueling combine
             Q = val + adv - mean(adv) into the linear head (no ReLU after it).
    """
    H, A = HIDDEN, action_size
    assert state_size <= LANES and A + 1 <= LANES and 2 * H <= LANES

    W = jnp.zeros((4, LANES, LANES), jnp.float32)
    W = W.at[0, :state_size, :H].set(p["w1"])
    W = W.at[1, :H, :H].set(p["w2"])
    W = W.at[2, :H, :H].set(p["w1_adv"])
    W = W.at[2, :H, H:2 * H].set(p["w1_val"])

    # raw block-diagonal head: cols [0:A) = advantage, col A = value
    W3 = jnp.zeros((LANES, LANES), jnp.float32)
    W3 = W3.at[:H, :A].set(p["w2_adv"])
    W3 = W3.at[H:2 * H, A:A + 1].set(p["w2_val"])
    b3 = jnp.zeros((LANES,), jnp.float32)
    b3 = b3.at[:A].set(p["b2_adv"].reshape(-1))
    b3 = b3.at[A].set(p["b2_val"].reshape(-1)[0])

    # combine matrix: C[i,j] = delta_ij - 1/A (i,j < A); C[A, j<A] = 1; else 0
    C = jnp.zeros((LANES, LANES), jnp.float32)
    C = C.at[:A, :A].set(jnp.eye(A, dtype=jnp.float32) - 1.0 / A)
    C = C.at[A, :A].set(1.0)
    W = W.at[3].set(W3 @ C)

    Bb = jnp.zeros((4, LANES), jnp.float32)
    Bb = Bb.at[0, :H].set(p["b1"].reshape(-1))
    Bb = Bb.at[1, :H].set(p["b2"].reshape(-1))
    Bb = Bb.at[2, :H].set(p["b1_adv"].reshape(-1))
    Bb = Bb.at[2, H:2 * H].set(p["b1_val"].reshape(-1))
    Bb = Bb.at[3].set(b3 @ C)

    return W.astype(weight_dtype), Bb  # biases stay f32


def reference_forward(x, p):
    relu = lambda t: jnp.maximum(t, 0.0)
    h = relu(x @ p["w1"] + p["b1"])
    h = relu(h @ p["w2"] + p["b2"])
    adv = relu(h @ p["w1_adv"] + p["b1_adv"]) @ p["w2_adv"] + p["b2_adv"]
    val = relu(h @ p["w1_val"] + p["b1_val"]) @ p["w2_val"] + p["b2_val"]
    return val + adv - jnp.mean(adv, axis=1, keepdims=True)


if __name__ == "__main__":
    batch, state_size, action_size = 2, 32, 8

    key = jax.random.PRNGKey(0)
    k_params, k_x = jax.random.split(key)
    params = init_params(k_params, state_size, action_size)
    x = jax.random.normal(k_x, (batch, state_size), jnp.float32)

    q_ref = jax.block_until_ready(reference_forward(x, params))

    # f32 weight slab: f32-exact (up to combine-fold summation-order rounding).
    w_f32, b_f32 = pack_params(params, state_size, action_size, jnp.float32)
    q_full = jax.block_until_ready(dueling_dqn_forward(x, w_f32, b_f32))
    np.testing.assert_allclose(np.asarray(q_full[:, :action_size]),
                               np.asarray(q_ref), rtol=2e-5, atol=2e-5)

    # bf16 weight slab (MXU-native on v5e/v6e/v7x): bf16 weights+activations at
    # the dot, f32 accumulation and f32 elementwise math; loose tolerance.
    w_bf16, b_bf = pack_params(params, state_size, action_size, jnp.bfloat16)
    q_bf = jax.block_until_ready(dueling_dqn_forward(x, w_bf16, b_bf))
    np.testing.assert_allclose(np.asarray(q_bf[:, :action_size]),
                               np.asarray(q_ref), rtol=5e-2, atol=5e-2)

    print("KERNEL_OK")
</pallas_src>

<mosaic_0001>
module attributes {stable_mosaic.version = 11 : i64} {
  func.func @dueling_dqn_kernel(%arg0: i32, %arg1: memref<8x32xf32, #tpu.memory_space<vmem>>, %arg2: memref<4x128x128xf32, #tpu.memory_space<vmem>>, %arg3: memref<4x128xf32, #tpu.memory_space<vmem>>, %arg4: memref<8x128xf32, #tpu.memory_space<vmem>>) attributes {dimension_semantics = [#tpu.dimension_semantics<parallel>], iteration_bounds = array<i64: 1>, scalar_prefetch = 0 : i64, scratch_operands = 0 : i64, tpu.core_type = #tpu.core_type<tc>, window_params = [{transform_indices = @transform_0, window_bounds = array<i64: 8, 32>}, {pipeline_mode = #tpu.pipeline_mode<synchronous>, transform_indices = @transform_1, window_bounds = array<i64: 4, 128, 128>}, {pipeline_mode = #tpu.pipeline_mode<synchronous>, transform_indices = @transform_2, window_bounds = array<i64: 4, 128>}, {transform_indices = @transform_3, window_bounds = array<i64: 8, 128>}]} {
    %c0 = arith.constant 0 : index
    %c0_0 = arith.constant 0 : index
    %0 = vector.load %arg1[%c0, %c0_0] : memref<8x32xf32, #tpu.memory_space<vmem>>, vector<8x32xf32>
    %c0_1 = arith.constant 0 : index
    %c0_2 = arith.constant 0 : index
    %c0_3 = arith.constant 0 : index
    %1 = vector.load %arg2[%c0_1, %c0_2, %c0_3] : memref<4x128x128xf32, #tpu.memory_space<vmem>>, vector<1x32x128xf32>
    %2 = vector.shape_cast %1 : vector<1x32x128xf32> to vector<32x128xf32>
    %cst = arith.constant dense<0.000000e+00> : vector<8x128xf32>
    %3 = tpu.matmul %0, %2, %cst {dimension_numbers = #tpu.dot_dimension_numbers<[1], [0], [0], [1], [0, 0, 1, 1], [], []>} : vector<8x32xf32>, vector<32x128xf32>, vector<8x128xf32> -> vector<8x128xf32>
    %c0_4 = arith.constant 0 : index
    %c0_5 = arith.constant 0 : index
    %4 = vector.load %arg3[%c0_4, %c0_5] : memref<4x128xf32, #tpu.memory_space<vmem>>, vector<1x128xf32>
    %5 = vector.broadcast %4 : vector<1x128xf32> to vector<8x128xf32>
    %6 = arith.addf %3, %5 : vector<8x128xf32>
    %cst_6 = arith.constant 0.000000e+00 : f32
    %7 = vector.broadcast %cst_6 : f32 to vector<8x128xf32>
    %8 = arith.maximumf %6, %7 : vector<8x128xf32>
    %c1 = arith.constant 1 : index
    %c0_7 = arith.constant 0 : index
    %c0_8 = arith.constant 0 : index
    %9 = vector.load %arg2[%c1, %c0_7, %c0_8] : memref<4x128x128xf32, #tpu.memory_space<vmem>>, vector<1x128x128xf32>
    %10 = vector.shape_cast %9 : vector<1x128x128xf32> to vector<128x128xf32>
    %cst_9 = arith.constant dense<0.000000e+00> : vector<8x128xf32>
    %11 = tpu.matmul %8, %10, %cst_9 {dimension_numbers = #tpu.dot_dimension_numbers<[1], [0], [0], [1], [0, 0, 1, 1], [], []>} : vector<8x128xf32>, vector<128x128xf32>, vector<8x128xf32> -> vector<8x128xf32>
    %c1_10 = arith.constant 1 : index
    %c0_11 = arith.constant 0 : index
    %12 = vector.load %arg3[%c1_10, %c0_11] : memref<4x128xf32, #tpu.memory_space<vmem>>, vector<1x128xf32>
    %13 = vector.broadcast %12 : vector<1x128xf32> to vector<8x128xf32>
    %14 = arith.addf %11, %13 : vector<8x128xf32>
    %cst_12 = arith.constant 0.000000e+00 : f32
    %15 = vector.broadcast %cst_12 : f32 to vector<8x128xf32>
    %16 = arith.maximumf %14, %15 : vector<8x128xf32>
    %c2 = arith.constant 2 : index
    %c0_13 = arith.constant 0 : index
    %c0_14 = arith.constant 0 : index
    %17 = vector.load %arg2[%c2, %c0_13, %c0_14] : memref<4x128x128xf32, #tpu.memory_space<vmem>>, vector<1x128x128xf32>
    %18 = vector.shape_cast %17 : vector<1x128x128xf32> to vector<128x128xf32>
    %cst_15 = arith.constant dense<0.000000e+00> : vector<8x128xf32>
    %19 = tpu.matmul %16, %18, %cst_15 {dimension_numbers = #tpu.dot_dimension_numbers<[1], [0], [0], [1], [0, 0, 1, 1], [], []>} : vector<8x128xf32>, vector<128x128xf32>, vector<8x128xf32> -> vector<8x128xf32>
    %c2_16 = arith.constant 2 : index
    %c0_17 = arith.constant 0 : index
    %20 = vector.load %arg3[%c2_16, %c0_17] : memref<4x128xf32, #tpu.memory_space<vmem>>, vector<1x128xf32>
    %21 = vector.broadcast %20 : vector<1x128xf32> to vector<8x128xf32>
    %22 = arith.addf %19, %21 : vector<8x128xf32>
    %cst_18 = arith.constant 0.000000e+00 : f32
    %23 = vector.broadcast %cst_18 : f32 to vector<8x128xf32>
    %24 = arith.maximumf %22, %23 : vector<8x128xf32>
    %c3 = arith.constant 3 : index
    %c0_19 = arith.constant 0 : index
    %c0_20 = arith.constant 0 : index
    %25 = vector.load %arg2[%c3, %c0_19, %c0_20] : memref<4x128x128xf32, #tpu.memory_space<vmem>>, vector<1x128x128xf32>
    %26 = vector.shape_cast %25 : vector<1x128x128xf32> to vector<128x128xf32>
    %cst_21 = arith.constant dense<0.000000e+00> : vector<8x128xf32>
    %27 = tpu.matmul %24, %26, %cst_21 {dimension_numbers = #tpu.dot_dimension_numbers<[1], [0], [0], [1], [0, 0, 1, 1], [], []>} : vector<8x128xf32>, vector<128x128xf32>, vector<8x128xf32> -> vector<8x128xf32>
    %c3_22 = arith.constant 3 : index
    %c0_23 = arith.constant 0 : index
    %28 = vector.load %arg3[%c3_22, %c0_23] : memref<4x128xf32, #tpu.memory_space<vmem>>, vector<1x128xf32>
    %29 = vector.broadcast %28 : vector<1x128xf32> to vector<8x128xf32>
    %30 = arith.addf %27, %29 : vector<8x128xf32>
    %c0_24 = arith.constant 0 : index
    %c0_25 = arith.constant 0 : index
    %31 = vector.load %arg4[%c0_24, %c0_25] : memref<8x128xf32, #tpu.memory_space<vmem>>, vector<8x128xf32>
    tpu.vector_store %arg4[%c0_24, %c0_25], %30 {strides = array<i32>} : memref<8x128xf32, #tpu.memory_space<vmem>>, vector<8x128xf32>,
    return
  }
  func.func @transform_0(%arg0: i32) -> (i32, i32) {
    %c0_i32 = arith.constant 0 : i32
    %c0_i32_0 = arith.constant 0 : i32
    return %arg0, %c0_i32 : i32, i32
  }
  func.func @transform_1(%arg0: i32) -> (i32, i32, i32) {
    %c0_i32 = arith.constant 0 : i32
    %c0_i32_0 = arith.constant 0 : i32
    %c0_i32_1 = arith.constant 0 : i32
    %c0_i32_2 = arith.constant 0 : i32
    return %c0_i32, %c0_i32_0, %c0_i32_1 : i32, i32, i32
  }
  func.func @transform_2(%arg0: i32) -> (i32, i32) {
    %c0_i32 = arith.constant 0 : i32
    %c0_i32_0 = arith.constant 0 : i32
    %c0_i32_1 = arith.constant 0 : i32
    return %c0_i32, %c0_i32_0 : i32, i32
  }
  func.func @transform_3(%arg0: i32) -> (i32, i32) {
    %c0_i32 = arith.constant 0 : i32
    %c0_i32_0 = arith.constant 0 : i32
    return %arg0, %c0_i32 : i32, i32
  }
}

</mosaic_0001>

<llo_original>
// kernel: tpu_custom_call.1
$region0: #{tpu_custom_call.1}
  #allocation0 [shape = 'u32[]', space=smem, size = 0x4, offset = 0x4, fixed_abs, tag = 'smem constant byte address 0x4 - core index']
  #allocation1 [shape = 'u32[144,128]{1,0:T(1,128)}', space=vmem, size = 0x12000, scoped, tag = 'internal scratch']
  %s0 = inlined_call_operand.hbm [shape: f32[2,32], index: 0, kind: input, shape index: {}]
  %s1 = inlined_call_operand.hbm [shape: f32[4,128,128], index: 1, kind: input, shape index: {}]
  %s2 = inlined_call_operand.hbm [shape: f32[4,128], index: 2, kind: input, shape index: {}]
  %s3 = inlined_call_operand.hbm [shape: f32[2,128], index: 3, kind: output, shape index: {}]
  %s4 = sld [smem:[#allocation0]]
  $region34: #{tpu_custom_call.1} parent=0
    _
  %s6 = ssub.s32 1, %s4
  %s7 = scalar_select 0, %s6, %s4
  $region1: #{tpu_custom_call.1} parent=0
    #allocation2 [shape = 'u8[4096]{0}', space=vmem, size = 0x1000, scoped, tag = 'input window, operand 0, single buffered']
    #allocation3 [shape = 's32[1]{0}', space=sflag, size = 0x4, scoped, tag = 'scoped memory for tpu_custom_call.1']
    #allocation4 [shape = 's32[1]{0}', space=sflag, size = 0x4, scoped, tag = 'scoped memory for tpu_custom_call.1']
    #allocation5 [shape = 'u8[262144]{0}', space=vmem, size = 0x40000, scoped, tag = 'input window, operand 1, single buffered']
    #allocation6 [shape = 's32[1]{0}', space=sflag, size = 0x4, scoped, tag = 'scoped memory for tpu_custom_call.1']
    #allocation7 [shape = 'u8[2048]{0}', space=vmem, size = 0x800, scoped, tag = 'input window, operand 2, single buffered']
    #allocation8 [shape = 'u8[4096]{0}', space=vmem, size = 0x1000, scoped, tag = 'output window, operand 0, single buffered']
    %8 = vsyncpa [#allocation3], 0
    %9 = vsyncpa [#allocation6], 0
    %10 = vsyncpa [#allocation4], 0
    // Predicated region
    $region2: #{tpu_custom_call.1} parent=1 // pred_check
      _
    $region3: #{tpu_custom_call.1} parent=1 // pred_check_branch
      %12 = sbr.rel (0) target = $region5
    $region4: #{tpu_custom_call.1} parent=1 // pred_region
      %s14 = ssub.s32 128, 32
      %15 = vsyncadd [#allocation3], %s14
      %s16 = sshll.u32 [#allocation2], 4
      %s17 = int_to_ptr.vmem [resolvable:$true] %s16
      %22 = dma.hbm_to_vmem [thread:$0]  %s0, 32, %s17, [#allocation3], 32, 32, 2
    $region5: #{tpu_custom_call.1} parent=1 // pred_fallthru
      _
    // Predicated region
    $region6: #{tpu_custom_call.1} parent=1 // pred_check
      _
    $region7: #{tpu_custom_call.1} parent=1 // pred_check_branch
      %24 = sbr.rel (0) target = $region9
    $region8: #{tpu_custom_call.1} parent=1 // pred_region
      %s26 = ssub.s32 8192, 8192
      %27 = vsyncadd [#allocation6], %s26
      %s28 = sshll.u32 [#allocation5], 4
      %s29 = int_to_ptr.vmem [resolvable:$true] %s28
      %34 = dma.hbm_to_vmem [thread:$0]  %s1, 8192, %s29, [#allocation6], 128, 128, 8
    $region9: #{tpu_custom_call.1} parent=1 // pred_fallthru
      _
    // Predicated region
    $region10: #{tpu_custom_call.1} parent=1 // pred_check
      _
    $region11: #{tpu_custom_call.1} parent=1 // pred_check_branch
      %36 = sbr.rel (0) target = $region13
    $region12: #{tpu_custom_call.1} parent=1 // pred_region
      %s38 = ssub.s32 64, 64
      %39 = vsyncadd [#allocation6], %s38
      %s41 = sshll.u32 [#allocation7], 4
      %s42 = int_to_ptr.vmem [resolvable:$true] %s41
      %44 = dma.hbm_to_vmem [thread:$0]  %s2, 64, %s42, [#allocation6]
    $region13: #{tpu_custom_call.1} parent=1 // pred_fallthru
      _
    // Predicated region
    $region14: #{tpu_custom_call.1} parent=1 // pred_check
      _
    $region15: #{tpu_custom_call.1} parent=1 // pred_check_branch
      %46 = sbr.rel (0) target = $region17
    $region16: #{tpu_custom_call.1} parent=1 // pred_region
      %47 = dma.done [#allocation3], 128
    $region17: #{tpu_custom_call.1} parent=1 // pred_fallthru
      _
    // Predicated region
    $region18: #{tpu_custom_call.1} parent=1 // pred_check
      _
    $region19: #{tpu_custom_call.1} parent=1 // pred_check_branch
      %49 = sbr.rel (0) target = $region21
    $region20: #{tpu_custom_call.1} parent=1 // pred_region
      %50 = dma.done [#allocation6], 8192
    $region21: #{tpu_custom_call.1} parent=1 // pred_fallthru
      _
    // Predicated region
    $region22: #{tpu_custom_call.1} parent=1 // pred_check
      _
    $region23: #{tpu_custom_call.1} parent=1 // pred_check_branch
      %52 = sbr.rel (0) target = $region25
    $region24: #{tpu_custom_call.1} parent=1 // pred_region
      %53 = dma.done [#allocation6], 64
    $region25: #{tpu_custom_call.1} parent=1 // pred_fallthru
      _
    %v54 = vld [vmem:[#allocation2] sm:$0xff]
    %v55 = vld [vmem:[#allocation5] sm:$0xff]
    %v56 = vld [vmem:[#allocation5 + $0x8] sm:$0xff]
    %v57 = vld [vmem:[#allocation5 + $0x10] sm:$0xff]
    %v58 = vld [vmem:[#allocation5 + $0x18] sm:$0xff]
    %v59 = vld [vmem:[#allocation7] sm:$0x1]
    %v60 = vlaneseq
    %v61 = vshrl.u32 %v60, 7
    %v62 = vsub.s32 0, %v61
    %v63 = vrot.slane %v59, %v62
    %vm64 = vcmask 261120
    %v66 = vsel %vm64, %v54, 0
    %68 = vmatprep.subr.mxu0 0.0
    %69 = vmatpush1.msra.mxu0 0.0
    %70 = vmatprep.subr.mxu0 0.0
    %71 = vmatpush1.msra.mxu0 0.0
    %72 = vmatprep.subr.mxu0 0.0
    %73 = vmatpush1.msra.mxu0 0.0
    %74 = vmatprep.subr.mxu0 0.0
    %75 = vmatpush1.msra.mxu0 0.0
    %76 = vmatprep.subr.mxu0 0.0
    %77 = vmatpush1.msra.mxu0 0.0
    %78 = vmatprep.subr.mxu0 0.0
    %79 = vmatpush1.msra.mxu0 0.0
    %80 = vmatprep.subr.mxu0 0.0
    %81 = vmatpush1.msra.mxu0 0.0
    %82 = vmatprep.subr.mxu0 0.0
    %83 = vmatpush1.msra.mxu0 0.0
    %84 = vmatprep.subr.mxu0 0.0
    %85 = vmatpush1.msra.mxu0 0.0
    %86 = vmatprep.subr.mxu0 0.0
    %87 = vmatpush1.msra.mxu0 0.0
    %88 = vmatprep.subr.mxu0 0.0
    %89 = vmatpush1.msra.mxu0 0.0
    %90 = vmatprep.subr.mxu0 0.0
    %91 = vmatpush1.msra.mxu0 0.0
    %92 = vmatprep.subr.mxu0 0.0
    %93 = vmatpush1.msra.mxu0 %v58
    %94 = vmatprep.subr.mxu0 0.0
    %95 = vmatpush1.msra.mxu0 %v57
    %96 = vmatprep.subr.mxu0 0.0
    %97 = vmatpush1.msra.mxu0 %v56
    %98 = vmatprep.subr.mxu0 0.0
    %99 = vmatpush1.msra.mxu0 %v55
    %100 = vmatprep.subr.mxu0 0.0
    %101 = vmatpush2.msra.mxu0 0.0
    %102 = vmatprep.subr.mxu0 0.0
    %103 = vmatpush2.msra.mxu0 0.0
    %104 = vmatprep.subr.mxu0 0.0
    %105 = vmatpush2.msra.mxu0 0.0
    %106 = vmatprep.subr.mxu0 0.0
    %107 = vmatpush2.msra.mxu0 0.0
    %108 = vmatprep.subr.mxu0 0.0
    %109 = vmatpush2.msra.mxu0 0.0
    %110 = vmatprep.subr.mxu0 0.0
    %111 = vmatpush2.msra.mxu0 0.0
    %112 = vmatprep.subr.mxu0 0.0
    %113 = vmatpush2.msra.mxu0 0.0
    %114 = vmatprep.subr.mxu0 0.0
    %115 = vmatpush2.msra.mxu0 0.0
    %116 = vmatprep.subr.mxu0 0.0
    %117 = vmatpush2.msra.mxu0 0.0
    %118 = vmatprep.subr.mxu0 0.0
    %119 = vmatpush2.msra.mxu0 0.0
    %120 = vmatprep.subr.mxu0 0.0
    %121 = vmatpush2.msra.mxu0 0.0
    %122 = vmatprep.subr.mxu0 0.0
    %123 = vmatpush2.msra.mxu0 0.0
    %124 = vmatprep.subr.mxu0 0.0
    %125 = vmatpush2.msra.mxu0 0.0
    %126 = vmatprep.subr.mxu0 0.0
    %127 = vmatpush2.msra.mxu0 0.0
    %128 = vmatprep.subr.mxu0 0.0
    %129 = vmatpush2.msra.mxu0 0.0
    %130 = vmatprep.subr.mxu0 0.0
    %131 = vmatpush2.msra.mxu0 0.0
    %132 = vmatprep.mubr.f32.mxu0 0.0
    %133 = vmatmul.mubr.f32.gmra.mxu0 %v66
    %v134 = vpop.f32.mrf.mxu0
    %v135 = vadd.f32 %v63, %v134
    %v136 = vpop.f32.mrf.mxu0
    %137 = vdwg.mxu0
    %v138 = vmax.f32 %v135, 0.0
    %s139 = scalar_lea.vmem [#allocation5], 128
    %v140 = vld [vmem:[%s139] sm:$0xff]
    %v141 = vld [vmem:[%s139 + $0x8] sm:$0xff]
    %v142 = vld [vmem:[%s139 + $0x10] sm:$0xff]
    %v143 = vld [vmem:[%s139 + $0x18] sm:$0xff]
    %v144 = vld [vmem:[%s139 + $0x20] sm:$0xff]
    %v145 = vld [vmem:[%s139 + $0x28] sm:$0xff]
    %v146 = vld [vmem:[%s139 + $0x30] sm:$0xff]
    %v147 = vld [vmem:[%s139 + $0x38] sm:$0xff]
    %v148 = vld [vmem:[%s139 + $0x40] sm:$0xff]
    %v149 = vld [vmem:[%s139 + $0x48] sm:$0xff]
    %v150 = vld [vmem:[%s139 + $0x50] sm:$0xff]
    %v151 = vld [vmem:[%s139 + $0x58] sm:$0xff]
    %v152 = vld [vmem:[%s139 + $0x60] sm:$0xff]
    %v153 = vld [vmem:[%s139 + $0x68] sm:$0xff]
    %v154 = vld [vmem:[%s139 + $0x70] sm:$0xff]
    %v155 = vld [vmem:[%s139 + $0x78] sm:$0xff]
    %v156 = vld [vmem:[#allocation7 + $0x1] sm:$0x1]
    %v157 = vlaneseq
    %v158 = vshrl.u32 %v157, 7
    %v159 = vsub.s32 0, %v158
    %v160 = vrot.slane %v156, %v159
    %161 = vmatprep.subr.mxu0 0.0
    %162 = vmatpush1.msra.mxu0 %v155
    %163 = vmatprep.subr.mxu0 0.0
    %164 = vmatpush1.msra.mxu0 %v154
    %165 = vmatprep.subr.mxu0 0.0
    %166 = vmatpush1.msra.mxu0 %v153
    %167 = vmatprep.subr.mxu0 0.0
    %168 = vmatpush1.msra.mxu0 %v152
    %169 = vmatprep.subr.mxu0 0.0
    %170 = vmatpush1.msra.mxu0 %v151
    %171 = vmatprep.subr.mxu0 0.0
    %172 = vmatpush1.msra.mxu0 %v150
    %173 = vmatprep.subr.mxu0 0.0
    %174 = vmatpush1.msra.mxu0 %v149
    %175 = vmatprep.subr.mxu0 0.0
    %176 = vmatpush1.msra.mxu0 %v148
    %177 = vmatprep.subr.mxu0 0.0
    %178 = vmatpush1.msra.mxu0 %v147
    %179 = vmatprep.subr.mxu0 0.0
    %180 = vmatpush1.msra.mxu0 %v146
    %181 = vmatprep.subr.mxu0 0.0
    %182 = vmatpush1.msra.mxu0 %v145
    %183 = vmatprep.subr.mxu0 0.0
    %184 = vmatpush1.msra.mxu0 %v144
    %185 = vmatprep.subr.mxu0 0.0
    %186 = vmatpush1.msra.mxu0 %v143
    %187 = vmatprep.subr.mxu0 0.0
    %188 = vmatpush1.msra.mxu0 %v142
    %189 = vmatprep.subr.mxu0 0.0
    %190 = vmatpush1.msra.mxu0 %v141
    %191 = vmatprep.subr.mxu0 0.0
    %192 = vmatpush1.msra.mxu0 %v140
    %193 = vmatprep.subr.mxu0 0.0
    %194 = vmatpush2.msra.mxu0 0.0
    %195 = vmatprep.subr.mxu0 0.0
    %196 = vmatpush2.msra.mxu0 0.0
    %197 = vmatprep.subr.mxu0 0.0
    %198 = vmatpush2.msra.mxu0 0.0
    %199 = vmatprep.subr.mxu0 0.0
    %200 = vmatpush2.msra.mxu0 0.0
    %201 = vmatprep.subr.mxu0 0.0
    %202 = vmatpush2.msra.mxu0 0.0
    %203 = vmatprep.subr.mxu0 0.0
    %204 = vmatpush2.msra.mxu0 0.0
    %205 = vmatprep.subr.mxu0 0.0
    %206 = vmatpush2.msra.mxu0 0.0
    %207 = vmatprep.subr.mxu0 0.0
    %208 = vmatpush2.msra.mxu0 0.0
    %209 = vmatprep.subr.mxu0 0.0
    %210 = vmatpush2.msra.mxu0 0.0
    %211 = vmatprep.subr.mxu0 0.0
    %212 = vmatpush2.msra.mxu0 0.0
    %213 = vmatprep.subr.mxu0 0.0
    %214 = vmatpush2.msra.mxu0 0.0
    %215 = vmatprep.subr.mxu0 0.0
    %216 = vmatpush2.msra.mxu0 0.0
    %217 = vmatprep.subr.mxu0 0.0
    %218 = vmatpush2.msra.mxu0 0.0
    %219 = vmatprep.subr.mxu0 0.0
    %220 = vmatpush2.msra.mxu0 0.0
    %221 = vmatprep.subr.mxu0 0.0
    %222 = vmatpush2.msra.mxu0 0.0
    %223 = vmatprep.subr.mxu0 0.0
    %224 = vmatpush2.msra.mxu0 0.0
    %225 = vmatprep.mubr.f32.mxu0 0.0
    %226 = vmatmul.mubr.f32.gmra.mxu0 %v138
    %v227 = vpop.f32.mrf.mxu0
    %v228 = vadd.f32 %v160, %v227
    %v229 = vpop.f32.mrf.mxu0
    %230 = vdwg.mxu0
    %v231 = vmax.f32 %v228, 0.0
    %s232 = scalar_lea.vmem [#allocation5], 256
    %v233 = vld [vmem:[%s232] sm:$0xff]
    %v234 = vld [vmem:[%s232 + $0x8] sm:$0xff]
    %v235 = vld [vmem:[%s232 + $0x10] sm:$0xff]
    %v236 = vld [vmem:[%s232 + $0x18] sm:$0xff]
    %v237 = vld [vmem:[%s232 + $0x20] sm:$0xff]
    %v238 = vld [vmem:[%s232 + $0x28] sm:$0xff]
    %v239 = vld [vmem:[%s232 + $0x30] sm:$0xff]
    %v240 = vld [vmem:[%s232 + $0x38] sm:$0xff]
    %v241 = vld [vmem:[%s232 + $0x40] sm:$0xff]
    %v242 = vld [vmem:[%s232 + $0x48] sm:$0xff]
    %v243 = vld [vmem:[%s232 + $0x50] sm:$0xff]
    %v244 = vld [vmem:[%s232 + $0x58] sm:$0xff]
    %v245 = vld [vmem:[%s232 + $0x60] sm:$0xff]
    %v246 = vld [vmem:[%s232 + $0x68] sm:$0xff]
    %v247 = vld [vmem:[%s232 + $0x70] sm:$0xff]
    %v248 = vld [vmem:[%s232 + $0x78] sm:$0xff]
    %v249 = vld [vmem:[#allocation7 + $0x2] sm:$0x1]
    %v250 = vlaneseq
    %v251 = vshrl.u32 %v250, 7
    %v252 = vsub.s32 0, %v251
    %v253 = vrot.slane %v249, %v252
    %254 = vmatprep.subr.mxu0 0.0
    %255 = vmatpush1.msra.mxu0 %v248
    %256 = vmatprep.subr.mxu0 0.0
    %257 = vmatpush1.msra.mxu0 %v247
    %258 = vmatprep.subr.mxu0 0.0
    %259 = vmatpush1.msra.mxu0 %v246
    %260 = vmatprep.subr.mxu0 0.0
    %261 = vmatpush1.msra.mxu0 %v245
    %262 = vmatprep.subr.mxu0 0.0
    %263 = vmatpush1.msra.mxu0 %v244
    %264 = vmatprep.subr.mxu0 0.0
    %265 = vmatpush1.msra.mxu0 %v243
    %266 = vmatprep.subr.mxu0 0.0
    %267 = vmatpush1.msra.mxu0 %v242
    %268 = vmatprep.subr.mxu0 0.0
    %269 = vmatpush1.msra.mxu0 %v241
    %270 = vmatprep.subr.mxu0 0.0
    %271 = vmatpush1.msra.mxu0 %v240
    %272 = vmatprep.subr.mxu0 0.0
    %273 = vmatpush1.msra.mxu0 %v239
    %274 = vmatprep.subr.mxu0 0.0
    %275 = vmatpush1.msra.mxu0 %v238
    %276 = vmatprep.subr.mxu0 0.0
    %277 = vmatpush1.msra.mxu0 %v237
    %278 = vmatprep.subr.mxu0 0.0
    %279 = vmatpush1.msra.mxu0 %v236
    %280 = vmatprep.subr.mxu0 0.0
    %281 = vmatpush1.msra.mxu0 %v235
    %282 = vmatprep.subr.mxu0 0.0
    %283 = vmatpush1.msra.mxu0 %v234
    %284 = vmatprep.subr.mxu0 0.0
    %285 = vmatpush1.msra.mxu0 %v233
    %286 = vmatprep.subr.mxu0 0.0
    %287 = vmatpush2.msra.mxu0 0.0
    %288 = vmatprep.subr.mxu0 0.0
    %289 = vmatpush2.msra.mxu0 0.0
    %290 = vmatprep.subr.mxu0 0.0
    %291 = vmatpush2.msra.mxu0 0.0
    %292 = vmatprep.subr.mxu0 0.0
    %293 = vmatpush2.msra.mxu0 0.0
    %294 = vmatprep.subr.mxu0 0.0
    %295 = vmatpush2.msra.mxu0 0.0
    %296 = vmatprep.subr.mxu0 0.0
    %297 = vmatpush2.msra.mxu0 0.0
    %298 = vmatprep.subr.mxu0 0.0
    %299 = vmatpush2.msra.mxu0 0.0
    %300 = vmatprep.subr.mxu0 0.0
    %301 = vmatpush2.msra.mxu0 0.0
    %302 = vmatprep.subr.mxu0 0.0
    %303 = vmatpush2.msra.mxu0 0.0
    %304 = vmatprep.subr.mxu0 0.0
    %305 = vmatpush2.msra.mxu0 0.0
    %306 = vmatprep.subr.mxu0 0.0
    %307 = vmatpush2.msra.mxu0 0.0
    %308 = vmatprep.subr.mxu0 0.0
    %309 = vmatpush2.msra.mxu0 0.0
    %310 = vmatprep.subr.mxu0 0.0
    %311 = vmatpush2.msra.mxu0 0.0
    %312 = vmatprep.subr.mxu0 0.0
    %313 = vmatpush2.msra.mxu0 0.0
    %314 = vmatprep.subr.mxu0 0.0
    %315 = vmatpush2.msra.mxu0 0.0
    %316 = vmatprep.subr.mxu0 0.0
    %317 = vmatpush2.msra.mxu0 0.0
    %318 = vmatprep.mubr.f32.mxu0 0.0
    %319 = vmatmul.mubr.f32.gmra.mxu0 %v231
    %v320 = vpop.f32.mrf.mxu0
    %v321 = vadd.f32 %v253, %v320
    %v322 = vpop.f32.mrf.mxu0
    %323 = vdwg.mxu0
    %v324 = vmax.f32 %v321, 0.0
    %s325 = scalar_lea.vmem [#allocation5], 384
    %v326 = vld [vmem:[%s325] sm:$0xff]
    %v327 = vld [vmem:[%s325 + $0x8] sm:$0xff]
    %v328 = vld [vmem:[%s325 + $0x10] sm:$0xff]
    %v329 = vld [vmem:[%s325 + $0x18] sm:$0xff]
    %v330 = vld [vmem:[%s325 + $0x20] sm:$0xff]
    %v331 = vld [vmem:[%s325 + $0x28] sm:$0xff]
    %v332 = vld [vmem:[%s325 + $0x30] sm:$0xff]
    %v333 = vld [vmem:[%s325 + $0x38] sm:$0xff]
    %v334 = vld [vmem:[%s325 + $0x40] sm:$0xff]
    %v335 = vld [vmem:[%s325 + $0x48] sm:$0xff]
    %v336 = vld [vmem:[%s325 + $0x50] sm:$0xff]
    %v337 = vld [vmem:[%s325 + $0x58] sm:$0xff]
    %v338 = vld [vmem:[%s325 + $0x60] sm:$0xff]
    %v339 = vld [vmem:[%s325 + $0x68] sm:$0xff]
    %v340 = vld [vmem:[%s325 + $0x70] sm:$0xff]
    %v341 = vld [vmem:[%s325 + $0x78] sm:$0xff]
    %v342 = vld [vmem:[#allocation7 + $0x3] sm:$0x1]
    %v343 = vlaneseq
    %v344 = vshrl.u32 %v343, 7
    %v345 = vsub.s32 0, %v344
    %v346 = vrot.slane %v342, %v345
    %347 = vmatprep.subr.mxu0 0.0
    %348 = vmatpush1.msra.mxu0 %v341
    %349 = vmatprep.subr.mxu0 0.0
    %350 = vmatpush1.msra.mxu0 %v340
    %351 = vmatprep.subr.mxu0 0.0
    %352 = vmatpush1.msra.mxu0 %v339
    %353 = vmatprep.subr.mxu0 0.0
    %354 = vmatpush1.msra.mxu0 %v338
    %355 = vmatprep.subr.mxu0 0.0
    %356 = vmatpush1.msra.mxu0 %v337
    %357 = vmatprep.subr.mxu0 0.0
    %358 = vmatpush1.msra.mxu0 %v336
    %359 = vmatprep.subr.mxu0 0.0
    %360 = vmatpush1.msra.mxu0 %v335
    %361 = vmatprep.subr.mxu0 0.0
    %362 = vmatpush1.msra.mxu0 %v334
    %363 = vmatprep.subr.mxu0 0.0
    %364 = vmatpush1.msra.mxu0 %v333
    %365 = vmatprep.subr.mxu0 0.0
    %366 = vmatpush1.msra.mxu0 %v332
    %367 = vmatprep.subr.mxu0 0.0
    %368 = vmatpush1.msra.mxu0 %v331
    %369 = vmatprep.subr.mxu0 0.0
    %370 = vmatpush1.msra.mxu0 %v330
    %371 = vmatprep.subr.mxu0 0.0
    %372 = vmatpush1.msra.mxu0 %v329
    %373 = vmatprep.subr.mxu0 0.0
    %374 = vmatpush1.msra.mxu0 %v328
    %375 = vmatprep.subr.mxu0 0.0
    %376 = vmatpush1.msra.mxu0 %v327
    %377 = vmatprep.subr.mxu0 0.0
    %378 = vmatpush1.msra.mxu0 %v326
    %379 = vmatprep.subr.mxu0 0.0
    %380 = vmatpush2.msra.mxu0 0.0
    %381 = vmatprep.subr.mxu0 0.0
    %382 = vmatpush2.msra.mxu0 0.0
    %383 = vmatprep.subr.mxu0 0.0
    %384 = vmatpush2.msra.mxu0 0.0
    %385 = vmatprep.subr.mxu0 0.0
    %386 = vmatpush2.msra.mxu0 0.0
    %387 = vmatprep.subr.mxu0 0.0
    %388 = vmatpush2.msra.mxu0 0.0
    %389 = vmatprep.subr.mxu0 0.0
    %390 = vmatpush2.msra.mxu0 0.0
    %391 = vmatprep.subr.mxu0 0.0
    %392 = vmatpush2.msra.mxu0 0.0
    %393 = vmatprep.subr.mxu0 0.0
    %394 = vmatpush2.msra.mxu0 0.0
    %395 = vmatprep.subr.mxu0 0.0
    %396 = vmatpush2.msra.mxu0 0.0
    %397 = vmatprep.subr.mxu0 0.0
    %398 = vmatpush2.msra.mxu0 0.0
    %399 = vmatprep.subr.mxu0 0.0
    %400 = vmatpush2.msra.mxu0 0.0
    %401 = vmatprep.subr.mxu0 0.0
    %402 = vmatpush2.msra.mxu0 0.0
    %403 = vmatprep.subr.mxu0 0.0
    %404 = vmatpush2.msra.mxu0 0.0
    %405 = vmatprep.subr.mxu0 0.0
    %406 = vmatpush2.msra.mxu0 0.0
    %407 = vmatprep.subr.mxu0 0.0
    %408 = vmatpush2.msra.mxu0 0.0
    %409 = vmatprep.subr.mxu0 0.0
    %410 = vmatpush2.msra.mxu0 0.0
    %411 = vmatprep.mubr.f32.mxu0 0.0
    %412 = vmatmul.mubr.f32.gmra.mxu0 %v324
    %v413 = vpop.f32.mrf.mxu0
    %v414 = vadd.f32 %v346, %v413
    %v415 = vpop.f32.mrf.mxu0
    %416 = vdwg.mxu0
    %417 = vst [vmem:[#allocation8] sm:$0xff] %v414
    // Predicated region
    $region26: #{tpu_custom_call.1} parent=1 // pred_check
      _
    $region27: #{tpu_custom_call.1} parent=1 // pred_check_branch
      %419 = sbr.rel (0) target = $region29
    $region28: #{tpu_custom_call.1} parent=1 // pred_region
      %s421 = ssub.s32 128, 32
      %422 = vsyncadd [#allocation4], %s421
      %s423 = sshll.u32 [#allocation8], 4
      %s424 = int_to_ptr.vmem [resolvable:$true] %s423
      %429 = dma.vmem_to_hbm [thread:$0]  %s424, 32, %s3, [#allocation4], 32, 32, 2
    $region29: #{tpu_custom_call.1} parent=1 // pred_fallthru
      _
    // Predicated region
    $region30: #{tpu_custom_call.1} parent=1 // pred_check
      _
    $region31: #{tpu_custom_call.1} parent=1 // pred_check_branch
      %431 = sbr.rel (0) target = $region33
    $region32: #{tpu_custom_call.1} parent=1 // pred_region
      %432 = dma.done [#allocation4], 128
    $region33: #{tpu_custom_call.1} parent=1 // pred_fallthru
      _
    %433 = vsyncpa [#allocation3], 1
    %434 = vsyncpa [#allocation6], 1
    %435 = vsyncpa [#allocation4], 1

</llo_original>
